<compile_context>
chip_gen: v6e
topology: v6e:2x2x1
jax: 0.10.0
libtpu: 0.0.40
codegen_flags: <defaults>
</compile_context>

<pallas_src>
import functools

import jax
import jax.numpy as jnp
from jax.experimental import pallas as pl
from jax.experimental.pallas import tpu as pltpu

LANES = 128
IN_LANES = 8          # padded input width  (features 0:3, carry at lane 7)
OUT_LANES = 8         # padded output width (results in lanes 0:2)
D_IN, H1, H2, D_OUT = 4, 10, 8, 3


def mlp_kernel(x_ref, w0_ref, w1_ref, w2_ref, o_ref, *, use_bf16=False):
    # x_ref: (TB, 8)   -- features in lanes 0:3, constant 1.0 in lane 7.
    # w0_ref: (8, 128), w1_ref: (128, 128), w2_ref: (128, 8): affine-augmented
    # (bias rows + carry column), zero-padded elsewhere.
    x = x_ref[...]
    w0 = w0_ref[...]
    w1 = w1_ref[...]
    w2 = w2_ref[...]
    if use_bf16:
        x = x.astype(jnp.bfloat16)
        w0 = w0.astype(jnp.bfloat16)
        w1 = w1.astype(jnp.bfloat16)
        w2 = w2.astype(jnp.bfloat16)

    h = jnp.maximum(jnp.dot(x, w0, preferred_element_type=jnp.float32), 0.0)
    if use_bf16:
        h = h.astype(jnp.bfloat16)
    h = jnp.maximum(jnp.dot(h, w1, preferred_element_type=jnp.float32), 0.0)
    if use_bf16:
        h = h.astype(jnp.bfloat16)
    o_ref[...] = jnp.dot(
        h, w2, preferred_element_type=jnp.float32).astype(o_ref.dtype)


def pack_params(params):
    """Pack W1/b1/W2/b2/W3/b3 into three zero-padded affine-augmented arrays.

    Call ONCE (outside the per-call path) and reuse the result.
      w0 (8, 128):   rows 0:4 = W1, row 7 = b1, w0[7,127] = 1.0 (carry -> h1 lane 127)
      w1 (128, 128): rows 0:10 = W2, row 127 = b2, w1[127,127] = 1.0 (carry -> h2)
      w2 (128, 8):   rows 0:8 = W3, row 127 = b3
    Padded rows/cols are exactly zero so they never contaminate real outputs;
    ReLU(1.0) = 1.0 keeps the bias-carry lane alive between layers.
    """
    w0 = jnp.zeros((IN_LANES, LANES), jnp.float32)
    w0 = w0.at[:D_IN, :H1].set(params["W1"])
    w0 = w0.at[IN_LANES - 1, :H1].set(params["b1"].reshape(-1))
    w0 = w0.at[IN_LANES - 1, LANES - 1].set(1.0)

    w1 = jnp.zeros((LANES, LANES), jnp.float32)
    w1 = w1.at[:H1, :H2].set(params["W2"])
    w1 = w1.at[LANES - 1, :H2].set(params["b2"].reshape(-1))
    w1 = w1.at[LANES - 1, LANES - 1].set(1.0)

    w2 = jnp.zeros((LANES, OUT_LANES), jnp.float32)
    w2 = w2.at[:H2, :D_OUT].set(params["W3"])
    w2 = w2.at[LANES - 1, :D_OUT].set(params["b3"].reshape(-1))
    return w0, w1, w2


def _round_up(a, m):
    return ((a + m - 1) // m) * m


@functools.partial(jax.jit, static_argnames=("tb", "use_bf16"))
def neural_network_forward(x, w0, w1, w2, *, tb=1024, use_bf16=False):
    """x: (B, 4) float32; (w0, w1, w2) from pack_params. Returns (B, 3)."""
    B = x.shape[0]

    # Batch tiling: sublane-aligned, and split into >=2 grid steps when possible
    # so dimension_semantics=('parallel',) shards across v7x's 2 TensorCores.
    Bp = _round_up(max(B, 8), 8)
    if Bp >= 16:
        tb_half = _round_up((Bp + 1) // 2, 8)
        TB = min(tb, tb_half)
    else:
        TB = Bp
    Bp = _round_up(Bp, TB)

    # Narrow (Bp, 8) input: features | zeros | bias-carry 1.0 in lane 7.
    x32 = x.astype(jnp.float32)
    lane_pad = jnp.zeros((B, IN_LANES - D_IN - 1), jnp.float32)
    carry = jnp.ones((B, 1), jnp.float32)
    xp = jnp.concatenate([x32, lane_pad, carry], axis=1)
    if Bp > B:
        xp = jnp.concatenate(
            [xp, jnp.zeros((Bp - B, IN_LANES), jnp.float32)], axis=0)

    kernel = functools.partial(mlp_kernel, use_bf16=use_bf16)

    out = pl.pallas_call(
        kernel,
        out_shape=jax.ShapeDtypeStruct((Bp, OUT_LANES), jnp.float32),
        grid_spec=pltpu.PrefetchScalarGridSpec(
            num_scalar_prefetch=0,
            grid=(Bp // TB,),
            in_specs=[
                pl.BlockSpec((TB, IN_LANES), lambda i: (i, 0)),       # x tile
                pl.BlockSpec((IN_LANES, LANES), lambda i: (0, 0)),    # resident w0
                pl.BlockSpec((LANES, LANES), lambda i: (0, 0)),       # resident w1
                pl.BlockSpec((LANES, OUT_LANES), lambda i: (0, 0)),   # resident w2
            ],
            out_specs=pl.BlockSpec((TB, OUT_LANES), lambda i: (i, 0)),
        ),
        compiler_params=pltpu.CompilerParams(
            dimension_semantics=("parallel",),
        ),
    )(xp, w0, w1, w2)

    return out[:B, :D_OUT]


def init_params(key):
    """Deterministic init matching nn.Linear default (U(-1/sqrt(fan_in), 1/sqrt(fan_in)))."""
    dims = [(D_IN, H1), (H1, H2), (H2, D_OUT)]
    params = {}
    keys = jax.random.split(key, 2 * len(dims))
    for i, (fan_in, fan_out) in enumerate(dims):
        bound = 1.0 / (fan_in ** 0.5)
        params[f"W{i+1}"] = jax.random.uniform(
            keys[2 * i], (fan_in, fan_out), minval=-bound, maxval=bound,
            dtype=jnp.float32)
        params[f"b{i+1}"] = jax.random.uniform(
            keys[2 * i + 1], (1, fan_out), minval=-bound, maxval=bound,
            dtype=jnp.float32)
    return params


if __name__ == "__main__":
    key = jax.random.PRNGKey(0)
    pkey, xkey = jax.random.split(key)
    params = init_params(pkey)
    packed = pack_params(params)  # packed once, reused across calls
    x = jax.random.normal(xkey, (8, D_IN), dtype=jnp.float32)  # batch=8, features=4

    # bf16 MXU path is a v5e-targeted optimization (f32 matmul is the binding
    # unit there); accumulation stays f32, tolerance is loosened accordingly.
    kind = jax.devices()[0].device_kind.lower()
    use_bf16 = ("v5e" in kind) or ("v5 lite" in kind) or ("v5lite" in kind)

    out = neural_network_forward(x, *packed, use_bf16=use_bf16)
    jax.block_until_ready(out)

    # Plain-JAX reference (same math as the PyTorch module).
    h1 = jnp.maximum(x @ params["W1"] + params["b1"], 0.0)
    h2 = jnp.maximum(h1 @ params["W2"] + params["b2"], 0.0)
    ref = h2 @ params["W3"] + params["b3"]

    tol = 5e-2 if use_bf16 else 1e-4
    assert out.shape == (8, D_OUT)
    assert jnp.allclose(out, ref, atol=tol, rtol=tol), (
        f"max abs err {float(jnp.max(jnp.abs(out - ref)))}")

    print("KERNEL_OK")
</pallas_src>

<mosaic_0001>
module attributes {stable_mosaic.version = 11 : i64} {
  func.func @mlp_kernel(%arg0: i32, %arg1: memref<8x8xf32, #tpu.memory_space<vmem>>, %arg2: memref<8x128xf32, #tpu.memory_space<vmem>>, %arg3: memref<128x128xf32, #tpu.memory_space<vmem>>, %arg4: memref<128x8xf32, #tpu.memory_space<vmem>>, %arg5: memref<8x8xf32, #tpu.memory_space<vmem>>) attributes {dimension_semantics = [#tpu.dimension_semantics<parallel>], iteration_bounds = array<i64: 1>, scalar_prefetch = 0 : i64, scratch_operands = 0 : i64, tpu.core_type = #tpu.core_type<tc>, window_params = [{transform_indices = @transform_0, window_bounds = array<i64: 8, 8>}, {pipeline_mode = #tpu.pipeline_mode<synchronous>, transform_indices = @transform_1, window_bounds = array<i64: 8, 128>}, {pipeline_mode = #tpu.pipeline_mode<synchronous>, transform_indices = @transform_2, window_bounds = array<i64: 128, 128>}, {pipeline_mode = #tpu.pipeline_mode<synchronous>, transform_indices = @transform_3, window_bounds = array<i64: 128, 8>}, {transform_indices = @transform_4, window_bounds = array<i64: 8, 8>}]} {
    %c0 = arith.constant 0 : index
    %c0_0 = arith.constant 0 : index
    %0 = vector.load %arg1[%c0, %c0_0] : memref<8x8xf32, #tpu.memory_space<vmem>>, vector<8x8xf32>
    %c0_1 = arith.constant 0 : index
    %c0_2 = arith.constant 0 : index
    %1 = vector.load %arg2[%c0_1, %c0_2] : memref<8x128xf32, #tpu.memory_space<vmem>>, vector<8x128xf32>
    %c0_3 = arith.constant 0 : index
    %c0_4 = arith.constant 0 : index
    %2 = vector.load %arg3[%c0_3, %c0_4] : memref<128x128xf32, #tpu.memory_space<vmem>>, vector<128x128xf32>
    %c0_5 = arith.constant 0 : index
    %c0_6 = arith.constant 0 : index
    %3 = vector.load %arg4[%c0_5, %c0_6] : memref<128x8xf32, #tpu.memory_space<vmem>>, vector<128x8xf32>
    %cst = arith.constant dense<0.000000e+00> : vector<8x128xf32>
    %4 = tpu.matmul %0, %1, %cst {dimension_numbers = #tpu.dot_dimension_numbers<[1], [0], [0], [1], [0, 0, 1, 1], [], []>} : vector<8x8xf32>, vector<8x128xf32>, vector<8x128xf32> -> vector<8x128xf32>
    %cst_7 = arith.constant 0.000000e+00 : f32
    %5 = vector.broadcast %cst_7 : f32 to vector<8x128xf32>
    %6 = arith.maximumf %4, %5 : vector<8x128xf32>
    %cst_8 = arith.constant dense<0.000000e+00> : vector<8x128xf32>
    %7 = tpu.matmul %6, %2, %cst_8 {dimension_numbers = #tpu.dot_dimension_numbers<[1], [0], [0], [1], [0, 0, 1, 1], [], []>} : vector<8x128xf32>, vector<128x128xf32>, vector<8x128xf32> -> vector<8x128xf32>
    %cst_9 = arith.constant 0.000000e+00 : f32
    %8 = vector.broadcast %cst_9 : f32 to vector<8x128xf32>
    %9 = arith.maximumf %7, %8 : vector<8x128xf32>
    %cst_10 = arith.constant dense<0.000000e+00> : vector<8x8xf32>
    %10 = tpu.matmul %9, %3, %cst_10 {dimension_numbers = #tpu.dot_dimension_numbers<[1], [0], [0], [1], [0, 0, 1, 1], [], []>} : vector<8x128xf32>, vector<128x8xf32>, vector<8x8xf32> -> vector<8x8xf32>
    %c0_11 = arith.constant 0 : index
    %c0_12 = arith.constant 0 : index
    %11 = vector.load %arg5[%c0_11, %c0_12] : memref<8x8xf32, #tpu.memory_space<vmem>>, vector<8x8xf32>
    tpu.vector_store %arg5[%c0_11, %c0_12], %10 {strides = array<i32>} : memref<8x8xf32, #tpu.memory_space<vmem>>, vector<8x8xf32>,
    return
  }
  func.func @transform_0(%arg0: i32) -> (i32, i32) {
    %c0_i32 = arith.constant 0 : i32
    %c0_i32_0 = arith.constant 0 : i32
    return %arg0, %c0_i32 : i32, i32
  }
  func.func @transform_1(%arg0: i32) -> (i32, i32) {
    %c0_i32 = arith.constant 0 : i32
    %c0_i32_0 = arith.constant 0 : i32
    %c0_i32_1 = arith.constant 0 : i32
    return %c0_i32, %c0_i32_0 : i32, i32
  }
  func.func @transform_2(%arg0: i32) -> (i32, i32) {
    %c0_i32 = arith.constant 0 : i32
    %c0_i32_0 = arith.constant 0 : i32
    %c0_i32_1 = arith.constant 0 : i32
    return %c0_i32, %c0_i32_0 : i32, i32
  }
  func.func @transform_3(%arg0: i32) -> (i32, i32) {
    %c0_i32 = arith.constant 0 : i32
    %c0_i32_0 = arith.constant 0 : i32
    %c0_i32_1 = arith.constant 0 : i32
    return %c0_i32, %c0_i32_0 : i32, i32
  }
  func.func @transform_4(%arg0: i32) -> (i32, i32) {
    %c0_i32 = arith.constant 0 : i32
    %c0_i32_0 = arith.constant 0 : i32
    return %arg0, %c0_i32 : i32, i32
  }
}

</mosaic_0001>

<llo_original>
// kernel: neural_network_forward.1
$region0: #{neural_network_forward.1}
  #allocation0 [shape = 'u32[]', space=smem, size = 0x4, offset = 0x4, fixed_abs, tag = 'smem constant byte address 0x4 - core index']
  #allocation1 [shape = 'u32[144,128]{1,0:T(1,128)}', space=vmem, size = 0x12000, scoped, tag = 'internal scratch']
  %s0 = inlined_call_operand.vmem [shape: f32[8,8], index: 0, kind: input, shape index: {}]
  %s1 = inlined_call_operand.vmem [shape: f32[8,128], index: 1, kind: input, shape index: {}]
  %s2 = inlined_call_operand.vmem [shape: f32[128,128], index: 2, kind: input, shape index: {}]
  %s3 = inlined_call_operand.vmem [shape: f32[128,8], index: 3, kind: input, shape index: {}]
  %s4 = inlined_call_operand.vmem [shape: f32[8,8], index: 4, kind: output, shape index: {}]
  %s5 = sld [smem:[#allocation0]]
  $region26: #{neural_network_forward.1} parent=0
    _
  %s7 = ssub.s32 1, %s5
  %s8 = scalar_select 0, %s7, %s5
  // Predicated region
  $region2: #{neural_network_forward.1} parent=0 // pred_check
    _
  $region3: #{neural_network_forward.1} parent=0 // pred_check_branch
    %10 = sbr.rel (0) target = $region5
  $region4: #{neural_network_forward.1} parent=0 // pred_region
    _
  $region5: #{neural_network_forward.1} parent=0 // pred_fallthru
    _
  // Predicated region
  $region6: #{neural_network_forward.1} parent=0 // pred_check
    _
  $region7: #{neural_network_forward.1} parent=0 // pred_check_branch
    %12 = sbr.rel (0) target = $region9
  $region8: #{neural_network_forward.1} parent=0 // pred_region
    _
  $region9: #{neural_network_forward.1} parent=0 // pred_fallthru
    _
  // Predicated region
  $region10: #{neural_network_forward.1} parent=0 // pred_check
    _
  $region11: #{neural_network_forward.1} parent=0 // pred_check_branch
    %14 = sbr.rel (0) target = $region13
  $region12: #{neural_network_forward.1} parent=0 // pred_region
    _
  $region13: #{neural_network_forward.1} parent=0 // pred_fallthru
    _
  // Predicated region
  $region14: #{neural_network_forward.1} parent=0 // pred_check
    _
  $region15: #{neural_network_forward.1} parent=0 // pred_check_branch
    %16 = sbr.rel (0) target = $region17
  $region16: #{neural_network_forward.1} parent=0 // pred_region
    _
  $region17: #{neural_network_forward.1} parent=0 // pred_fallthru
    _
  %v17 = vld [vmem:[%s0] sm:$0xff]
  %v18 = vld [vmem:[%s1] sm:$0xff]
  %v19 = vld [vmem:[%s2] sm:$0xff]
  %v20 = vld [vmem:[%s2 + $0x8] sm:$0xff]
  %v21 = vld [vmem:[%s2 + $0x10] sm:$0xff]
  %v22 = vld [vmem:[%s2 + $0x18] sm:$0xff]
  %v23 = vld [vmem:[%s2 + $0x20] sm:$0xff]
  %v24 = vld [vmem:[%s2 + $0x28] sm:$0xff]
  %v25 = vld [vmem:[%s2 + $0x30] sm:$0xff]
  %v26 = vld [vmem:[%s2 + $0x38] sm:$0xff]
  %v27 = vld [vmem:[%s2 + $0x40] sm:$0xff]
  %v28 = vld [vmem:[%s2 + $0x48] sm:$0xff]
  %v29 = vld [vmem:[%s2 + $0x50] sm:$0xff]
  %v30 = vld [vmem:[%s2 + $0x58] sm:$0xff]
  %v31 = vld [vmem:[%s2 + $0x60] sm:$0xff]
  %v32 = vld [vmem:[%s2 + $0x68] sm:$0xff]
  %v33 = vld [vmem:[%s2 + $0x70] sm:$0xff]
  %v34 = vld [vmem:[%s2 + $0x78] sm:$0xff]
  %v35 = vld [vmem:[%s3] sm:$0xff]
  %v36 = vld [vmem:[%s3 + $0x8] sm:$0xff]
  %v37 = vld [vmem:[%s3 + $0x10] sm:$0xff]
  %v38 = vld [vmem:[%s3 + $0x18] sm:$0xff]
  %v39 = vld [vmem:[%s3 + $0x20] sm:$0xff]
  %v40 = vld [vmem:[%s3 + $0x28] sm:$0xff]
  %v41 = vld [vmem:[%s3 + $0x30] sm:$0xff]
  %v42 = vld [vmem:[%s3 + $0x38] sm:$0xff]
  %v43 = vld [vmem:[%s3 + $0x40] sm:$0xff]
  %v44 = vld [vmem:[%s3 + $0x48] sm:$0xff]
  %v45 = vld [vmem:[%s3 + $0x50] sm:$0xff]
  %v46 = vld [vmem:[%s3 + $0x58] sm:$0xff]
  %v47 = vld [vmem:[%s3 + $0x60] sm:$0xff]
  %v48 = vld [vmem:[%s3 + $0x68] sm:$0xff]
  %v49 = vld [vmem:[%s3 + $0x70] sm:$0xff]
  %v50 = vld [vmem:[%s3 + $0x78] sm:$0xff]
  %vm51 = vcmask 64512
  %v53 = vsel %vm51, %v17, 0
  %55 = vmatprep.subr.mxu0 0.0
  %56 = vmatpush1.msra.mxu0 0.0
  %57 = vmatprep.subr.mxu0 0.0
  %58 = vmatpush1.msra.mxu0 0.0
  %59 = vmatprep.subr.mxu0 0.0
  %60 = vmatpush1.msra.mxu0 0.0
  %61 = vmatprep.subr.mxu0 0.0
  %62 = vmatpush1.msra.mxu0 0.0
  %63 = vmatprep.subr.mxu0 0.0
  %64 = vmatpush1.msra.mxu0 0.0
  %65 = vmatprep.subr.mxu0 0.0
  %66 = vmatpush1.msra.mxu0 0.0
  %67 = vmatprep.subr.mxu0 0.0
  %68 = vmatpush1.msra.mxu0 0.0
  %69 = vmatprep.subr.mxu0 0.0
  %70 = vmatpush1.msra.mxu0 0.0
  %71 = vmatprep.subr.mxu0 0.0
  %72 = vmatpush1.msra.mxu0 0.0
  %73 = vmatprep.subr.mxu0 0.0
  %74 = vmatpush1.msra.mxu0 0.0
  %75 = vmatprep.subr.mxu0 0.0
  %76 = vmatpush1.msra.mxu0 0.0
  %77 = vmatprep.subr.mxu0 0.0
  %78 = vmatpush1.msra.mxu0 0.0
  %79 = vmatprep.subr.mxu0 0.0
  %80 = vmatpush1.msra.mxu0 0.0
  %81 = vmatprep.subr.mxu0 0.0
  %82 = vmatpush1.msra.mxu0 0.0
  %83 = vmatprep.subr.mxu0 0.0
  %84 = vmatpush1.msra.mxu0 0.0
  %85 = vmatprep.subr.mxu0 0.0
  %86 = vmatpush1.msra.mxu0 %v18
  %87 = vmatprep.subr.mxu0 0.0
  %88 = vmatpush2.msra.mxu0 0.0
  %89 = vmatprep.subr.mxu0 0.0
  %90 = vmatpush2.msra.mxu0 0.0
  %91 = vmatprep.subr.mxu0 0.0
  %92 = vmatpush2.msra.mxu0 0.0
  %93 = vmatprep.subr.mxu0 0.0
  %94 = vmatpush2.msra.mxu0 0.0
  %95 = vmatprep.subr.mxu0 0.0
  %96 = vmatpush2.msra.mxu0 0.0
  %97 = vmatprep.subr.mxu0 0.0
  %98 = vmatpush2.msra.mxu0 0.0
  %99 = vmatprep.subr.mxu0 0.0
  %100 = vmatpush2.msra.mxu0 0.0
  %101 = vmatprep.subr.mxu0 0.0
  %102 = vmatpush2.msra.mxu0 0.0
  %103 = vmatprep.subr.mxu0 0.0
  %104 = vmatpush2.msra.mxu0 0.0
  %105 = vmatprep.subr.mxu0 0.0
  %106 = vmatpush2.msra.mxu0 0.0
  %107 = vmatprep.subr.mxu0 0.0
  %108 = vmatpush2.msra.mxu0 0.0
  %109 = vmatprep.subr.mxu0 0.0
  %110 = vmatpush2.msra.mxu0 0.0
  %111 = vmatprep.subr.mxu0 0.0
  %112 = vmatpush2.msra.mxu0 0.0
  %113 = vmatprep.subr.mxu0 0.0
  %114 = vmatpush2.msra.mxu0 0.0
  %115 = vmatprep.subr.mxu0 0.0
  %116 = vmatpush2.msra.mxu0 0.0
  %117 = vmatprep.subr.mxu0 0.0
  %118 = vmatpush2.msra.mxu0 0.0
  %119 = vmatprep.mubr.f32.mxu0 0.0
  %120 = vmatmul.mubr.f32.gmra.mxu0 %v53
  %v121 = vpop.f32.mrf.mxu0
  %v122 = vadd.f32 0.0, %v121
  %v123 = vpop.f32.mrf.mxu0
  %124 = vdwg.mxu0
  %v125 = vmax.f32 %v122, 0.0
  %126 = vmatprep.subr.mxu0 0.0
  %127 = vmatpush1.msra.mxu0 %v34
  %128 = vmatprep.subr.mxu0 0.0
  %129 = vmatpush1.msra.mxu0 %v33
  %130 = vmatprep.subr.mxu0 0.0
  %131 = vmatpush1.msra.mxu0 %v32
  %132 = vmatprep.subr.mxu0 0.0
  %133 = vmatpush1.msra.mxu0 %v31
  %134 = vmatprep.subr.mxu0 0.0
  %135 = vmatpush1.msra.mxu0 %v30
  %136 = vmatprep.subr.mxu0 0.0
  %137 = vmatpush1.msra.mxu0 %v29
  %138 = vmatprep.subr.mxu0 0.0
  %139 = vmatpush1.msra.mxu0 %v28
  %140 = vmatprep.subr.mxu0 0.0
  %141 = vmatpush1.msra.mxu0 %v27
  %142 = vmatprep.subr.mxu0 0.0
  %143 = vmatpush1.msra.mxu0 %v26
  %144 = vmatprep.subr.mxu0 0.0
  %145 = vmatpush1.msra.mxu0 %v25
  %146 = vmatprep.subr.mxu0 0.0
  %147 = vmatpush1.msra.mxu0 %v24
  %148 = vmatprep.subr.mxu0 0.0
  %149 = vmatpush1.msra.mxu0 %v23
  %150 = vmatprep.subr.mxu0 0.0
  %151 = vmatpush1.msra.mxu0 %v22
  %152 = vmatprep.subr.mxu0 0.0
  %153 = vmatpush1.msra.mxu0 %v21
  %154 = vmatprep.subr.mxu0 0.0
  %155 = vmatpush1.msra.mxu0 %v20
  %156 = vmatprep.subr.mxu0 0.0
  %157 = vmatpush1.msra.mxu0 %v19
  %158 = vmatprep.subr.mxu0 0.0
  %159 = vmatpush2.msra.mxu0 0.0
  %160 = vmatprep.subr.mxu0 0.0
  %161 = vmatpush2.msra.mxu0 0.0
  %162 = vmatprep.subr.mxu0 0.0
  %163 = vmatpush2.msra.mxu0 0.0
  %164 = vmatprep.subr.mxu0 0.0
  %165 = vmatpush2.msra.mxu0 0.0
  %166 = vmatprep.subr.mxu0 0.0
  %167 = vmatpush2.msra.mxu0 0.0
  %168 = vmatprep.subr.mxu0 0.0
  %169 = vmatpush2.msra.mxu0 0.0
  %170 = vmatprep.subr.mxu0 0.0
  %171 = vmatpush2.msra.mxu0 0.0
  %172 = vmatprep.subr.mxu0 0.0
  %173 = vmatpush2.msra.mxu0 0.0
  %174 = vmatprep.subr.mxu0 0.0
  %175 = vmatpush2.msra.mxu0 0.0
  %176 = vmatprep.subr.mxu0 0.0
  %177 = vmatpush2.msra.mxu0 0.0
  %178 = vmatprep.subr.mxu0 0.0
  %179 = vmatpush2.msra.mxu0 0.0
  %180 = vmatprep.subr.mxu0 0.0
  %181 = vmatpush2.msra.mxu0 0.0
  %182 = vmatprep.subr.mxu0 0.0
  %183 = vmatpush2.msra.mxu0 0.0
  %184 = vmatprep.subr.mxu0 0.0
  %185 = vmatpush2.msra.mxu0 0.0
  %186 = vmatprep.subr.mxu0 0.0
  %187 = vmatpush2.msra.mxu0 0.0
  %188 = vmatprep.subr.mxu0 0.0
  %189 = vmatpush2.msra.mxu0 0.0
  %190 = vmatprep.mubr.f32.mxu0 0.0
  %191 = vmatmul.mubr.f32.gmra.mxu0 %v125
  %v192 = vpop.f32.mrf.mxu0
  %v193 = vadd.f32 0.0, %v192
  %v194 = vpop.f32.mrf.mxu0
  %195 = vdwg.mxu0
  %v196 = vmax.f32 %v193, 0.0
  %197 = vmatprep.subr.mxu0 0.0
  %198 = vmatpush1.msra.mxu0 %v50
  %199 = vmatprep.subr.mxu0 0.0
  %200 = vmatpush1.msra.mxu0 %v49
  %201 = vmatprep.subr.mxu0 0.0
  %202 = vmatpush1.msra.mxu0 %v48
  %203 = vmatprep.subr.mxu0 0.0
  %204 = vmatpush1.msra.mxu0 %v47
  %205 = vmatprep.subr.mxu0 0.0
  %206 = vmatpush1.msra.mxu0 %v46
  %207 = vmatprep.subr.mxu0 0.0
  %208 = vmatpush1.msra.mxu0 %v45
  %209 = vmatprep.subr.mxu0 0.0
  %210 = vmatpush1.msra.mxu0 %v44
  %211 = vmatprep.subr.mxu0 0.0
  %212 = vmatpush1.msra.mxu0 %v43
  %213 = vmatprep.subr.mxu0 0.0
  %214 = vmatpush1.msra.mxu0 %v42
  %215 = vmatprep.subr.mxu0 0.0
  %216 = vmatpush1.msra.mxu0 %v41
  %217 = vmatprep.subr.mxu0 0.0
  %218 = vmatpush1.msra.mxu0 %v40
  %219 = vmatprep.subr.mxu0 0.0
  %220 = vmatpush1.msra.mxu0 %v39
  %221 = vmatprep.subr.mxu0 0.0
  %222 = vmatpush1.msra.mxu0 %v38
  %223 = vmatprep.subr.mxu0 0.0
  %224 = vmatpush1.msra.mxu0 %v37
  %225 = vmatprep.subr.mxu0 0.0
  %226 = vmatpush1.msra.mxu0 %v36
  %227 = vmatprep.subr.mxu0 0.0
  %228 = vmatpush1.msra.mxu0 %v35
  %229 = vmatprep.subr.mxu0 0.0
  %230 = vmatpush2.msra.mxu0 0.0
  %231 = vmatprep.subr.mxu0 0.0
  %232 = vmatpush2.msra.mxu0 0.0
  %233 = vmatprep.subr.mxu0 0.0
  %234 = vmatpush2.msra.mxu0 0.0
  %235 = vmatprep.subr.mxu0 0.0
  %236 = vmatpush2.msra.mxu0 0.0
  %237 = vmatprep.subr.mxu0 0.0
  %238 = vmatpush2.msra.mxu0 0.0
  %239 = vmatprep.subr.mxu0 0.0
  %240 = vmatpush2.msra.mxu0 0.0
  %241 = vmatprep.subr.mxu0 0.0
  %242 = vmatpush2.msra.mxu0 0.0
  %243 = vmatprep.subr.mxu0 0.0
  %244 = vmatpush2.msra.mxu0 0.0
  %245 = vmatprep.subr.mxu0 0.0
  %246 = vmatpush2.msra.mxu0 0.0
  %247 = vmatprep.subr.mxu0 0.0
  %248 = vmatpush2.msra.mxu0 0.0
  %249 = vmatprep.subr.mxu0 0.0
  %250 = vmatpush2.msra.mxu0 0.0
  %251 = vmatprep.subr.mxu0 0.0
  %252 = vmatpush2.msra.mxu0 0.0
  %253 = vmatprep.subr.mxu0 0.0
  %254 = vmatpush2.msra.mxu0 0.0
  %255 = vmatprep.subr.mxu0 0.0
  %256 = vmatpush2.msra.mxu0 0.0
  %257 = vmatprep.subr.mxu0 0.0
  %258 = vmatpush2.msra.mxu0 0.0
  %259 = vmatprep.subr.mxu0 0.0
  %260 = vmatpush2.msra.mxu0 0.0
  %261 = vmatprep.mubr.f32.mxu0 0.0
  %262 = vmatmul.mubr.f32.gmra.mxu0 %v196
  %v263 = vpop.f32.mrf.mxu0
  %v264 = vadd.f32 0.0, %v263
  %v265 = vpop.f32.mrf.mxu0
  %266 = vdwg.mxu0
  %267 = vst.msk [vmem:[%s4] sm:$0xff] %vm51, %v264
  // Predicated region
  $region18: #{neural_network_forward.1} parent=0 // pred_check
    _
  $region19: #{neural_network_forward.1} parent=0 // pred_check_branch
    %269 = sbr.rel (0) target = $region21
  $region20: #{neural_network_forward.1} parent=0 // pred_region
    _
  $region21: #{neural_network_forward.1} parent=0 // pred_fallthru
    _
  // Predicated region
  $region22: #{neural_network_forward.1} parent=0 // pred_check
    _
  $region23: #{neural_network_forward.1} parent=0 // pred_check_branch
    %271 = sbr.rel (0) target = $region25
  $region24: #{neural_network_forward.1} parent=0 // pred_region
    _
  $region25: #{neural_network_forward.1} parent=0 // pred_fallthru
    _

</llo_original>
